<compile_context>
chip_gen: v7x
topology: tpu7x:2x2x1
jax: 0.10.0
libtpu: 0.0.40
codegen_flags: <defaults>
</compile_context>

<pallas_src>
import functools

import jax
import jax.numpy as jnp
from jax import lax
from jax.experimental import pallas as pl
from jax.experimental.pallas import tpu as pltpu

_H = 15            # hidden width of the head (fixed by the module: Linear(F, 15))
_HP = 16           # sublane-aligned hidden width (zero-padded; inert)
_NEG_SLOPE = 0.01  # nn.LeakyReLU default negative_slope


def _mlp_head_kernel(x_ref, w1t_ref, b1_ref, w2_ref, b2_ref, o_ref, *,
                     feature_major):
    """One batch tile of the MLP head, computed batch-on-lanes.

    x_ref:   (F, TB) if feature_major else (TB, F)   f32, streamed per step
    w1t_ref: (HP, F) f32   -- W1^T, rows >= 15 zero-padded, VMEM-resident
    b1_ref:  (HP, 1) f32   -- resident
    w2_ref:  (HP, 1) f32   -- resident
    b2_ref:  (1,)    f32   -- SMEM scalar
    o_ref:   (1, TB) f32   -- batch on the lane axis (lane-dense store)
    """
    if feature_major:
        # Plain NN dot: (HP, F) @ (F, TB); no relayout of the streamed tile.
        dnums = (((1,), (0,)), ((), ()))
    else:
        # NT dot: contract F on both operands; Mosaic relayouts the x tile to
        # (F, TB) for the MXU RHS (hidden under the tile DMA at large TB).
        dnums = (((1,), (1,)), ((), ()))
    h = lax.dot_general(w1t_ref[...], x_ref[...], dimension_numbers=dnums,
                        preferred_element_type=jnp.float32)       # (HP, TB)
    h = h + b1_ref[...]                                           # bias
    h = jnp.where(h > 0, h, jnp.float32(_NEG_SLOPE) * h)          # LeakyReLU
    # Second layer (15 -> 1): VPU multiply + short sublane reduce (no MXU).
    y = jnp.sum(h * w2_ref[...], axis=0, keepdims=True) + b2_ref[0]
    o_ref[...] = y.astype(o_ref.dtype)


def _select_block_b(B, F, *, vmem_budget_bytes, max_block_b, requested):
    """Pick the batch tile from a VMEM budget (all-f32 working set).

    Per batch row: double-buffered x tile (2*F*4) + f32 hidden intermediate
    (4*HP) + double-buffered (1, TB) output (2*4).
    """
    per_row = 2 * F * 4 + 4 * _HP + 2 * 4
    tb = min(vmem_budget_bytes // per_row, max_block_b)
    if requested is not None:
        tb = min(tb, requested)
    tb = (tb // 128) * 128            # lane/sublane aligned tiles
    if tb <= 0 or tb >= B:
        return B                      # single full-batch block
    return tb


@functools.partial(jax.jit, static_argnames=("feature_major", "block_b"))
def ann_forward(x, w1, b1, w2, b2, *, feature_major=False, block_b=None):
    """Pallas implementation of ANN.forward's linear head.

    x  : (B, F) float32, or (F, B) float32 if feature_major=True
         -- concatenated si_module outputs
    w1 : (F, 15) float32   (stored (in, out))
    b1 : (15,)   float32
    w2 : (15, 1) float32
    b2 : (1,)    float32
    returns (B,) float32   -- soc_hat (flattened)
    """
    if feature_major:
        F, B = x.shape
    else:
        B, F = x.shape
    H = w1.shape[1]

    tb = _select_block_b(B, F, vmem_budget_bytes=32 * 1024 * 1024,
                         max_block_b=64 * 1024, requested=block_b)
    grid = (pl.cdiv(B, tb),)

    # Padded, VMEM-resident weights (tiny; prepared once, fused by XLA).
    w1t = jnp.zeros((_HP, F), jnp.float32).at[:H, :].set(w1.T.astype(jnp.float32))
    b1p = jnp.zeros((_HP, 1), jnp.float32).at[:H, 0].set(b1.astype(jnp.float32))
    w2p = jnp.zeros((_HP, 1), jnp.float32).at[:H, 0].set(
        w2.reshape(-1).astype(jnp.float32))
    b2p = b2.reshape(1).astype(jnp.float32)

    if feature_major:
        x_spec = pl.BlockSpec((F, tb), lambda i: (0, i))
    else:
        x_spec = pl.BlockSpec((tb, F), lambda i: (i, 0))

    cost = pl.CostEstimate(
        flops=2 * B * F * H + 4 * B * H,
        transcendentals=0,
        bytes_accessed=B * F * 4 + (_HP * F + 2 * _HP + 1) * 4 + B * 4,
    )

    kernel = functools.partial(_mlp_head_kernel, feature_major=feature_major)

    out = pl.pallas_call(
        kernel,
        out_shape=jax.ShapeDtypeStruct((1, B), jnp.float32),
        grid=grid,
        in_specs=[
            x_spec,                                          # x: streamed tile
            pl.BlockSpec((_HP, F), lambda i: (0, 0)),        # W1^T: resident
            pl.BlockSpec((_HP, 1), lambda i: (0, 0)),        # b1: resident
            pl.BlockSpec((_HP, 1), lambda i: (0, 0)),        # w2: resident
            pl.BlockSpec(memory_space=pltpu.MemorySpace.SMEM),  # b2: scalar
        ],
        out_specs=pl.BlockSpec((1, tb), lambda i: (0, i)),
        compiler_params=pltpu.CompilerParams(
            dimension_semantics=("parallel",),     # megacore sharding on v7x
            vmem_limit_bytes=48 * 1024 * 1024,     # safe on v7x's 64 MiB VMEM
        ),
        cost_estimate=cost,
    )(x.astype(jnp.float32), w1t, b1p, w2p, b2p)

    # matches `soc_hat.reshape(-1)` in the PyTorch module
    return out.reshape(-1)


def _ref_forward(x, w1, b1, w2, b2):
    # Pure float32 reference (kernel now also computes in f32 end to end).
    h = jnp.dot(x, w1, precision=lax.Precision.HIGHEST) + b1
    h = jnp.where(h > 0, h, 0.01 * h)
    y = jnp.dot(h, w2, precision=lax.Precision.HIGHEST) + b2
    return y.reshape(-1)


def _init_linear(key, fan_in, fan_out):
    # Deterministic init mimicking PyTorch nn.Linear: U(-1/sqrt(fan_in), +...).
    kw, kb = jax.random.split(key)
    bound = 1.0 / jnp.sqrt(jnp.float32(fan_in))
    w = jax.random.uniform(kw, (fan_in, fan_out), jnp.float32, -bound, bound)
    b = jax.random.uniform(kb, (fan_out,), jnp.float32, -bound, bound)
    return w, b


if __name__ == "__main__":
    key = jax.random.PRNGKey(0)
    k_x, k_l1, k_l2, k_mid, k_big = jax.random.split(key, 5)

    batch = 8
    linear_input_length = 32   # = sum of si_module output lengths (synthetic)

    # synthetic concatenated si_module outputs
    x = jax.random.normal(k_x, (batch, linear_input_length), jnp.float32)
    w1, b1 = _init_linear(k_l1, linear_input_length, 15)
    w2, b2 = _init_linear(k_l2, 15, 1)

    soc_hat = jax.block_until_ready(ann_forward(x, w1, b1, w2, b2))
    ref = _ref_forward(x, w1, b1, w2, b2)
    assert soc_hat.shape == (batch,), soc_hat.shape
    assert jnp.allclose(soc_hat, ref, atol=1e-3, rtol=1e-3), (soc_hat, ref)

    # Feature-major input path (preferred when the upstream producer can emit
    # features on the leading axis): no per-step relayout of the x tile.
    soc_fm = jax.block_until_ready(
        ann_forward(x.T, w1, b1, w2, b2, feature_major=True))
    assert jnp.allclose(soc_fm, ref, atol=1e-3, rtol=1e-3)

    # Multi-step tiled grid (block_b override forces several grid steps).
    big_batch = 4096
    xb = jax.random.normal(k_big, (big_batch, linear_input_length), jnp.float32)
    soc_big = jax.block_until_ready(ann_forward(xb, w1, b1, w2, b2, block_b=1024))
    assert soc_big.shape == (big_batch,), soc_big.shape
    assert jnp.allclose(soc_big, _ref_forward(xb, w1, b1, w2, b2),
                        atol=1e-3, rtol=1e-3)

    # Partial final tile + feature-major + multi-step grid.
    odd_batch = 2500
    xo = jax.random.normal(k_mid, (odd_batch, linear_input_length), jnp.float32)
    soc_odd = jax.block_until_ready(
        ann_forward(xo.T, w1, b1, w2, b2, feature_major=True, block_b=1024))
    assert soc_odd.shape == (odd_batch,), soc_odd.shape
    assert jnp.allclose(soc_odd, _ref_forward(xo, w1, b1, w2, b2),
                        atol=1e-3, rtol=1e-3)

    print("KERNEL_OK")
</pallas_src>

<mosaic_0001>
module attributes {stable_mosaic.version = 11 : i64} {
  func.func @_mlp_head_kernel(%arg0: i32, %arg1: memref<8x32xf32, #tpu.memory_space<vmem>>, %arg2: memref<16x32xf32, #tpu.memory_space<vmem>>, %arg3: memref<16x1xf32, #tpu.memory_space<vmem>>, %arg4: memref<16x1xf32, #tpu.memory_space<vmem>>, %arg5: memref<1xf32, #tpu.memory_space<smem>>, %arg6: memref<1x8xf32, #tpu.memory_space<vmem>>) attributes {dimension_semantics = [#tpu.dimension_semantics<parallel>], iteration_bounds = array<i64: 1>, scalar_prefetch = 0 : i64, scratch_operands = 0 : i64, tpu.core_type = #tpu.core_type<tc>, window_params = [{transform_indices = @transform_0, window_bounds = array<i64: 8, 32>}, {pipeline_mode = #tpu.pipeline_mode<synchronous>, transform_indices = @transform_1, window_bounds = array<i64: 16, 32>}, {pipeline_mode = #tpu.pipeline_mode<synchronous>, transform_indices = @transform_2, window_bounds = array<i64: 16, 1>}, {pipeline_mode = #tpu.pipeline_mode<synchronous>, transform_indices = @transform_3, window_bounds = array<i64: 16, 1>}, {transform_indices = @transform_4, window_bounds = array<i64: 1>}, {transform_indices = @transform_5, window_bounds = array<i64: 1, 8>}]} {
    %c0 = arith.constant 0 : index
    %c0_0 = arith.constant 0 : index
    %0 = vector.load %arg2[%c0, %c0_0] : memref<16x32xf32, #tpu.memory_space<vmem>>, vector<16x32xf32>
    %c0_1 = arith.constant 0 : index
    %c0_2 = arith.constant 0 : index
    %1 = vector.load %arg1[%c0_1, %c0_2] : memref<8x32xf32, #tpu.memory_space<vmem>>, vector<8x32xf32>
    %cst = arith.constant dense<0.000000e+00> : vector<16x8xf32>
    %2 = tpu.matmul %0, %1, %cst {dimension_numbers = #tpu.dot_dimension_numbers<[1], [1], [0], [0], [0, 0, 1, 0], [], []>} : vector<16x32xf32>, vector<8x32xf32>, vector<16x8xf32> -> vector<16x8xf32>
    %c0_3 = arith.constant 0 : index
    %c0_4 = arith.constant 0 : index
    %3 = vector.load %arg3[%c0_3, %c0_4] : memref<16x1xf32, #tpu.memory_space<vmem>>, vector<16x1xf32>
    %4 = vector.broadcast %3 : vector<16x1xf32> to vector<16x8xf32>
    %5 = arith.addf %2, %4 : vector<16x8xf32>
    %cst_5 = arith.constant 0.000000e+00 : f32
    %6 = vector.broadcast %cst_5 : f32 to vector<16x8xf32>
    %7 = arith.cmpf ogt, %5, %6 : vector<16x8xf32>
    %cst_6 = arith.constant 0.00999999977 : f32
    %8 = vector.broadcast %cst_6 : f32 to vector<16x8xf32>
    %9 = arith.mulf %8, %5 : vector<16x8xf32>
    %10 = arith.select %7, %5, %9 : vector<16x8xi1>, vector<16x8xf32>
    %c0_7 = arith.constant 0 : index
    %c0_8 = arith.constant 0 : index
    %11 = vector.load %arg4[%c0_7, %c0_8] : memref<16x1xf32, #tpu.memory_space<vmem>>, vector<16x1xf32>
    %12 = vector.broadcast %11 : vector<16x1xf32> to vector<16x8xf32>
    %13 = arith.mulf %10, %12 : vector<16x8xf32>
    %cst_9 = arith.constant dense<0.000000e+00> : vector<8xf32>
    %14 = vector.multi_reduction <add>, %13, %cst_9 [0] : vector<16x8xf32> to vector<8xf32>
    %15 = vector.shape_cast %14 : vector<8xf32> to vector<1x8xf32>
    %c0_10 = arith.constant 0 : index
    %16 = memref.load %arg5[%c0_10] : memref<1xf32, #tpu.memory_space<smem>>
    %17 = vector.broadcast %16 : f32 to vector<1x8xf32>
    %18 = arith.addf %15, %17 : vector<1x8xf32>
    %c0_11 = arith.constant 0 : index
    %c0_12 = arith.constant 0 : index
    %19 = vector.load %arg6[%c0_11, %c0_12] : memref<1x8xf32, #tpu.memory_space<vmem>>, vector<1x8xf32>
    tpu.vector_store %arg6[%c0_11, %c0_12], %18 {strides = array<i32>} : memref<1x8xf32, #tpu.memory_space<vmem>>, vector<1x8xf32>,
    return
  }
  func.func @transform_0(%arg0: i32) -> (i32, i32) {
    %c0_i32 = arith.constant 0 : i32
    %c0_i32_0 = arith.constant 0 : i32
    return %arg0, %c0_i32 : i32, i32
  }
  func.func @transform_1(%arg0: i32) -> (i32, i32) {
    %c0_i32 = arith.constant 0 : i32
    %c0_i32_0 = arith.constant 0 : i32
    %c0_i32_1 = arith.constant 0 : i32
    return %c0_i32, %c0_i32_0 : i32, i32
  }
  func.func @transform_2(%arg0: i32) -> (i32, i32) {
    %c0_i32 = arith.constant 0 : i32
    %c0_i32_0 = arith.constant 0 : i32
    %c0_i32_1 = arith.constant 0 : i32
    return %c0_i32, %c0_i32_0 : i32, i32
  }
  func.func @transform_3(%arg0: i32) -> (i32, i32) {
    %c0_i32 = arith.constant 0 : i32
    %c0_i32_0 = arith.constant 0 : i32
    %c0_i32_1 = arith.constant 0 : i32
    return %c0_i32, %c0_i32_0 : i32, i32
  }
  func.func @transform_4(%arg0: i32) -> i32 {
    %c0_i32 = arith.constant 0 : i32
    %c0_i32_0 = arith.constant 0 : i32
    return %c0_i32 : i32
  }
  func.func @transform_5(%arg0: i32) -> (i32, i32) {
    %c0_i32 = arith.constant 0 : i32
    %c0_i32_0 = arith.constant 0 : i32
    return %c0_i32, %arg0 : i32, i32
  }
}

</mosaic_0001>

<llo_original>
// kernel: ann_forward.1
$region0: #{ann_forward.1}
  #allocation0 [shape = 'u32[]', space=smem, size = 0x4, offset = 0x4, fixed_abs, tag = 'smem constant byte address 0x4 - core index']
  #allocation1 [shape = 'u32[144,128]{1,0:T(1,128)}', space=vmem, size = 0x12000, scoped, tag = 'internal scratch']
  #allocation2 [shape = 'f32[1]{0:T(128)S(6)}', space=smem, size = 0x200, scoped, tag = 'scoped memory for ann_forward.1']
  %s0 = inlined_call_operand.vmem [shape: f32[8,32], index: 0, kind: input, shape index: {}]
  %s1 = inlined_call_operand.vmem [shape: f32[16,32], index: 1, kind: input, shape index: {}]
  %s2 = inlined_call_operand.vmem [shape: f32[16,1], index: 2, kind: input, shape index: {}]
  %s3 = inlined_call_operand.vmem [shape: f32[16,1], index: 3, kind: input, shape index: {}]
  %s4 = inlined_call_operand.<no memory space> [shape: f32[1], index: 4, kind: input, shape index: {}]
  %s5 = inlined_call_operand.hbm [shape: f32[1,8], index: 5, kind: output, shape index: {}]
  %s6 = sld [smem:[#allocation0]]
  $region30: #{ann_forward.1} parent=0
    _
  %s8 = ssub.s32 1, %s6
  %s9 = scalar_select 0, %s8, %s6
  %10 = sst [smem:[#allocation2]] %s4
  $region1: #{ann_forward.1} parent=0
    #allocation3 [shape = 'u8[512]{0}', space=vmem, size = 0x400, scoped, tag = 'output window, operand 0, single buffered']
    #allocation4 [shape = 's32[1]{0}', space=sflag, size = 0x4, scoped, tag = 'scoped memory for ann_forward.1']
    %11 = vsyncpa [#allocation4], 0
    // Predicated region
    $region2: #{ann_forward.1} parent=1 // pred_check
      _
    $region3: #{ann_forward.1} parent=1 // pred_check_branch
      %13 = sbr.rel (0) target = $region5
    $region4: #{ann_forward.1} parent=1 // pred_region
      _
    $region5: #{ann_forward.1} parent=1 // pred_fallthru
      _
    // Predicated region
    $region6: #{ann_forward.1} parent=1 // pred_check
      _
    $region7: #{ann_forward.1} parent=1 // pred_check_branch
      %15 = sbr.rel (0) target = $region9
    $region8: #{ann_forward.1} parent=1 // pred_region
      _
    $region9: #{ann_forward.1} parent=1 // pred_fallthru
      _
    // Predicated region
    $region10: #{ann_forward.1} parent=1 // pred_check
      _
    $region11: #{ann_forward.1} parent=1 // pred_check_branch
      %17 = sbr.rel (0) target = $region13
    $region12: #{ann_forward.1} parent=1 // pred_region
      _
    $region13: #{ann_forward.1} parent=1 // pred_fallthru
      _
    // Predicated region
    $region14: #{ann_forward.1} parent=1 // pred_check
      _
    $region15: #{ann_forward.1} parent=1 // pred_check_branch
      %19 = sbr.rel (0) target = $region17
    $region16: #{ann_forward.1} parent=1 // pred_region
      _
    $region17: #{ann_forward.1} parent=1 // pred_fallthru
      _
    // Predicated region
    $region18: #{ann_forward.1} parent=1 // pred_check
      _
    $region19: #{ann_forward.1} parent=1 // pred_check_branch
      %21 = sbr.rel (0) target = $region21
    $region20: #{ann_forward.1} parent=1 // pred_region
      _
    $region21: #{ann_forward.1} parent=1 // pred_fallthru
      _
    %v22 = vld [vmem:[%s1] sm:$0xff]
    %v23 = vld [vmem:[%s1 + $0x8] sm:$0xff]
    %v24 = vld [vmem:[%s0] sm:$0xff]
    %v25 = vld [vmem:[%s2] sm:$0xff]
    %v26 = vld [vmem:[%s2 + $0x8] sm:$0xff]
    %28 = vset.pattern.permute.xlu0 0
    %29 = vperm.xlu0 %28, %v25
    %v30 = vpop.permute.xlu0 %29
    %33 = vset.pattern.permute.xlu0 0
    %34 = vperm.xlu0 %33, %v26
    %v35 = vpop.permute.xlu0 %34
    %vm37 = vcmask 261120
    %v39 = vsel %vm37, %v22, 0
    %v42 = vsel %vm37, %v23, 0
    %v45 = vsel %vm37, %v24, 0
    %47 = vmatprep.subr.mxu0 0.0
    %48 = vmatpush1.xpose.msra.mxu0 %v45
    %49 = vmatprep.subr.mxu0 0.0
    %50 = vmatpush1.xpose.msra.mxu0 0.0
    %51 = vmatprep.subr.mxu0 0.0
    %52 = vmatpush1.xpose.msra.mxu0 0.0
    %53 = vmatprep.subr.mxu0 0.0
    %54 = vmatpush1.xpose.msra.mxu0 0.0
    %55 = vmatprep.subr.mxu0 0.0
    %56 = vmatpush1.xpose.msra.mxu0 0.0
    %57 = vmatprep.subr.mxu0 0.0
    %58 = vmatpush1.xpose.msra.mxu0 0.0
    %59 = vmatprep.subr.mxu0 0.0
    %60 = vmatpush1.xpose.msra.mxu0 0.0
    %61 = vmatprep.subr.mxu0 0.0
    %62 = vmatpush1.xpose.msra.mxu0 0.0
    %63 = vmatprep.subr.mxu0 0.0
    %64 = vmatpush1.xpose.msra.mxu0 0.0
    %65 = vmatprep.subr.mxu0 0.0
    %66 = vmatpush1.xpose.msra.mxu0 0.0
    %67 = vmatprep.subr.mxu0 0.0
    %68 = vmatpush1.xpose.msra.mxu0 0.0
    %69 = vmatprep.subr.mxu0 0.0
    %70 = vmatpush1.xpose.msra.mxu0 0.0
    %71 = vmatprep.subr.mxu0 0.0
    %72 = vmatpush1.xpose.msra.mxu0 0.0
    %73 = vmatprep.subr.mxu0 0.0
    %74 = vmatpush1.xpose.msra.mxu0 0.0
    %75 = vmatprep.subr.mxu0 0.0
    %76 = vmatpush1.xpose.msra.mxu0 0.0
    %77 = vmatprep.subr.mxu0 0.0
    %78 = vmatpush1.xpose.msra.mxu0 0.0
    %79 = vmatprep.subr.mxu0 0.0
    %80 = vmatpush1.xpose.msra.mxu0 0.0
    %81 = vmatprep.subr.mxu0 0.0
    %82 = vmatpush1.xpose.msra.mxu0 0.0
    %83 = vmatprep.subr.mxu0 0.0
    %84 = vmatpush1.xpose.msra.mxu0 0.0
    %85 = vmatprep.subr.mxu0 0.0
    %86 = vmatpush1.xpose.msra.mxu0 0.0
    %87 = vmatprep.subr.mxu0 0.0
    %88 = vmatpush1.xpose.msra.mxu0 0.0
    %89 = vmatprep.subr.mxu0 0.0
    %90 = vmatpush1.xpose.msra.mxu0 0.0
    %91 = vmatprep.subr.mxu0 0.0
    %92 = vmatpush1.xpose.msra.mxu0 0.0
    %93 = vmatprep.subr.mxu0 0.0
    %94 = vmatpush1.xpose.msra.mxu0 0.0
    %95 = vmatprep.subr.mxu0 0.0
    %96 = vmatpush1.xpose.msra.mxu0 0.0
    %97 = vmatprep.subr.mxu0 0.0
    %98 = vmatpush1.xpose.msra.mxu0 0.0
    %99 = vmatprep.subr.mxu0 0.0
    %100 = vmatpush1.xpose.msra.mxu0 0.0
    %101 = vmatprep.subr.mxu0 0.0
    %102 = vmatpush1.xpose.msra.mxu0 0.0
    %103 = vmatprep.subr.mxu0 0.0
    %104 = vmatpush1.xpose.msra.mxu0 0.0
    %105 = vmatprep.subr.mxu0 0.0
    %106 = vmatpush1.xpose.msra.mxu0 0.0
    %107 = vmatprep.subr.mxu0 0.0
    %108 = vmatpush1.xpose.msra.mxu0 0.0
    %109 = vmatprep.subr.mxu0 0.0
    %110 = vmatpush1.xpose.msra.mxu0 0.0
    %111 = vmatprep.mubr.f32.mxu0 0.0
    %112 = vmatmul.mubr.f32.gmra.mrb[0].mxu0 %v39
    %v113 = vpop.f32.mrb[0].mxu0
    %v114 = vadd.f32 %v30, %v113
    %v115 = vpop.f32.mrb[0].mxu0
    %116 = vmatprep.mubr.f32.mxu0 0.0
    %117 = vmatmul.mubr.f32.gmra.mrb[0].mxu0 %v42
    %v118 = vpop.f32.mrb[0].mxu0
    %v119 = vadd.f32 %v35, %v118
    %v120 = vpop.f32.mrb[0].mxu0
    %121 = vdwg.mxu0
    %vm122 = vcmp.gt.f32.partialorder %v114, 0.0
    %vm123 = vcmp.gt.f32.partialorder %v119, 0.0
    %v124 = vmul.f32 %v114, 0.01
    %v125 = vmul.f32 %v119, 0.01
    %v126 = vsel %vm122, %v114, %v124
    %v127 = vsel %vm123, %v119, %v125
    %v128 = vld [vmem:[%s3] sm:$0xff]
    %v129 = vld [vmem:[%s3 + $0x8] sm:$0xff]
    %131 = vset.pattern.permute.xlu0 0
    %132 = vperm.xlu0 %131, %v128
    %v133 = vpop.permute.xlu0 %132
    %136 = vset.pattern.permute.xlu0 0
    %137 = vperm.xlu0 %136, %v129
    %v138 = vpop.permute.xlu0 %137
    %v140 = vmul.f32 %v126, %v133
    %v141 = vmul.f32 %v127, %v138
    %vm142 = vcmask 64512
    %v143 = vsel %vm142, %v140, 0.0
    %v144 = vsel %vm142, %v141, 0.0
    %v145 = vadd.f32 %v143, %v144
    %v146 = vrot.slane %v145, 4
    %v147 = vadd.f32 %v145, %v146
    %v148 = vrot.slane %v147, 2
    %v149 = vadd.f32 %v147, %v148
    %v150 = vrot.slane %v149, 1
    %v151 = vadd.f32 %v149, %v150
    %s152 = sld [smem:[#allocation2]]
    %v153 = vstv %s152
    %v154 = vadd.f32 %v151, %v153
    %vm155 = vcmask 57344
    %156 = vst.msk [vmem:[#allocation3] sm:$0x1] %vm155, %v154
    // Predicated region
    $region22: #{ann_forward.1} parent=1 // pred_check
      _
    $region23: #{ann_forward.1} parent=1 // pred_check_branch
      %158 = sbr.rel (0) target = $region25
    $region24: #{ann_forward.1} parent=1 // pred_region
      %s160 = ssub.s32 16, 16
      %161 = vsyncadd [#allocation4], %s160
      %s163 = sshll.u32 [#allocation3], 4
      %s164 = int_to_ptr.vmem [resolvable:$true] %s163
      %166 = dma.vmem_to_hbm [thread:$0]  %s164, 16, %s5, [#allocation4]
    $region25: #{ann_forward.1} parent=1 // pred_fallthru
      _
    // Predicated region
    $region26: #{ann_forward.1} parent=1 // pred_check
      _
    $region27: #{ann_forward.1} parent=1 // pred_check_branch
      %168 = sbr.rel (0) target = $region29
    $region28: #{ann_forward.1} parent=1 // pred_region
      %169 = dma.done [#allocation4], 16
    $region29: #{ann_forward.1} parent=1 // pred_fallthru
      _
    %170 = vsyncpa [#allocation4], 1

</llo_original>
